<compile_context>
chip_gen: v5e
topology: v5e:2x2
jax: 0.10.0
libtpu: 0.0.40
codegen_flags: <defaults>
</compile_context>

<pallas_src>
import jax
import jax.numpy as jnp
from jax.experimental import pallas as pl
from jax.experimental.pallas import tpu as pltpu

# ---- "config" (small, deterministic, synthetic; lane-dense dims) ----
HIDDEN = 128         # config.hidden_size
MOE_INTER = 128      # config.moe_intermediate_size  (fused gate+up N = 256)
NUM_EXPERTS = 8      # config.num_experts
TOP_K = 2            # config.num_experts_per_tok
NORM_TOPK_PROB = True
# hidden_act = "silu"


def _round_up(x, m):
    return (x + m - 1) // m * m


# ---------------- one-time weight preparation (init, NOT per-call) ----------------

def prepare_moe_params(params):
    """Repack PyTorch-layout weights once, at init time.

    params (PyTorch nn.Linear layout, weight = (out, in)):
      gate:      (E, H)
      gate_proj: (E, I, H)
      up_proj:   (E, I, H)
      down_proj: (E, H, I)
    """
    gate_t = params["gate"].T                                  # (H, E)
    gw_t = jnp.transpose(params["gate_proj"], (0, 2, 1))       # (E, H, I)
    uw_t = jnp.transpose(params["up_proj"], (0, 2, 1))         # (E, H, I)
    gate_up = jnp.concatenate([gw_t, uw_t], axis=-1)           # (E, H, 2I)
    down = jnp.transpose(params["down_proj"], (0, 2, 1))       # (E, I, H)
    return {"gate_t": gate_t, "gate_up": gate_up, "down": down}


# ---------------- Pallas kernel ----------------

def _moe_expert_kernel(active_ref, rw_ref, x_ref, gu_ref, dw_ref, out_ref, acc_ref):
    # grid = (token_tiles, experts); expert axis is the innermost reduction.
    t = pl.program_id(0)
    e = pl.program_id(1)

    @pl.when(e == 0)
    def _init():
        acc_ref[...] = jnp.zeros_like(acc_ref)

    # Skip all MXU/VPU work if no token in this tile routed to expert e
    # (activity flag is a scalar-prefetched SMEM table).
    @pl.when(active_ref[t, e] > 0)
    def _compute():
        x = x_ref[...]                                                  # (tm, H)
        # fused gate+up matmul: one (tm,H)@(H,2I) MXU push, f32 accumulation
        gu = jnp.dot(x, gu_ref[0], preferred_element_type=jnp.float32)  # (tm, 2I)
        inter = gu.shape[-1] // 2
        g = gu[:, :inter]
        u = gu[:, inter:]
        h = jax.nn.silu(g) * u                                          # f32 VPU/EUP
        y = jnp.dot(h.astype(dw_ref.dtype), dw_ref[0],
                    preferred_element_type=jnp.float32)                 # (tm, H) f32
        # this expert's per-token routing weight, laid out as (tm, 1)
        acc_ref[...] += y * rw_ref[0]

    @pl.when(e == pl.num_programs(1) - 1)
    def _finalize():
        out_ref[...] = acc_ref[...].astype(out_ref.dtype)


# ---------------- forward wrapper (no per-call transposes) ----------------

def qwen3_moe_sparse_block(hidden_states, prepared, *, token_tile=256):
    """Returns (final_hidden_states (B, S, H), router_logits (B*S, E))."""
    B, S, H = hidden_states.shape
    T = B * S
    x = hidden_states.reshape(T, H)

    # -- router logits + top-k routing (XLA glue) --
    # A (T,H)@(H,E) matmul is far below pallas_call overhead; keep it in XLA.
    router_logits = jnp.dot(x, prepared["gate_t"])                   # (T, E), x.dtype
    # TODO(synk): top-k selection stays in JAX — Pallas has no sort/top-k primitive.
    probs = jax.nn.softmax(router_logits.astype(jnp.float32), axis=-1)
    topk_w, topk_idx = jax.lax.top_k(probs, TOP_K)
    if NORM_TOPK_PROB:
        topk_w = topk_w / jnp.sum(topk_w, axis=-1, keepdims=True)
    topk_w = topk_w.astype(hidden_states.dtype)                      # module semantics

    # dense routing weights as (E, T): vectorized one_hot, no scatter-add
    one_hot = jax.nn.one_hot(topk_idx, NUM_EXPERTS, dtype=jnp.float32)   # (T, K, E)
    rw_et = jnp.einsum("tke,tk->et", one_hot, topk_w.astype(jnp.float32))  # (E, T)

    # -- pad token axis to a sublane-friendly tile --
    tm = min(token_tile, _round_up(T, 8))
    t_pad = _round_up(T, tm)
    num_tiles = t_pad // tm
    if t_pad != T:
        x_p = jnp.pad(x, ((0, t_pad - T), (0, 0)))
        rw_et = jnp.pad(rw_et, ((0, 0), (0, t_pad - T)))
    else:
        x_p = x
    rw = rw_et[:, :, None]                                           # (E, T_pad, 1) f32

    # per-(tile, expert) activity flags for the in-kernel compute skip (SMEM)
    active = (rw_et.reshape(NUM_EXPERTS, num_tiles, tm) != 0.0).any(axis=-1)
    active = active.T.astype(jnp.int32)                              # (num_tiles, E)

    # -- expert MLPs + weighted accumulation (Pallas hot path) --
    gate_up = prepared["gate_up"]   # (E, H, 2I)
    down = prepared["down"]         # (E, I, H)
    two_i = gate_up.shape[-1]
    inter = two_i // 2

    out = pl.pallas_call(
        _moe_expert_kernel,
        out_shape=jax.ShapeDtypeStruct((t_pad, H), hidden_states.dtype),
        grid_spec=pltpu.PrefetchScalarGridSpec(
            num_scalar_prefetch=1,                                   # `active` -> SMEM
            grid=(num_tiles, NUM_EXPERTS),
            in_specs=[
                pl.BlockSpec((1, tm, 1), lambda t, e, a: (e, t, 0)),      # rw (E,T,1)
                pl.BlockSpec((tm, H), lambda t, e, a: (t, 0)),            # x  (T,H)
                pl.BlockSpec((1, H, two_i), lambda t, e, a: (e, 0, 0)),   # gate+up
                pl.BlockSpec((1, inter, H), lambda t, e, a: (e, 0, 0)),   # down
            ],
            out_specs=pl.BlockSpec((tm, H), lambda t, e, a: (t, 0)),
            scratch_shapes=[pltpu.VMEM((tm, H), jnp.float32)],            # f32 accumulator
        ),
        compiler_params=pltpu.CompilerParams(
            # token axis parallel (uses both v7x TensorCores); expert axis is
            # the reduction and must stay innermost / arbitrary.
            dimension_semantics=("parallel", "arbitrary"),
        ),
    )(active, rw, x_p, gate_up, down)

    out = out[:T]
    return out.reshape(B, S, H), router_logits


# ---------------- pure-JAX reference (PyTorch-layout weights) ----------------

def reference(hidden_states, params):
    B, S, H = hidden_states.shape
    x = hidden_states.reshape(-1, H)
    logits = x @ params["gate"].T
    probs = jax.nn.softmax(logits.astype(jnp.float32), axis=-1)
    tw, ti = jax.lax.top_k(probs, TOP_K)
    if NORM_TOPK_PROB:
        tw = tw / jnp.sum(tw, axis=-1, keepdims=True)
    tw = tw.astype(x.dtype)
    out = jnp.zeros_like(x)
    for e in range(NUM_EXPERTS):
        g = x @ params["gate_proj"][e].T
        u = x @ params["up_proj"][e].T
        y = (jax.nn.silu(g) * u) @ params["down_proj"][e].T
        w_e = jnp.sum(jnp.where(ti == e, tw, 0.0), axis=-1, keepdims=True)
        out = out + y * w_e
    return out.reshape(B, S, H), logits


# ---------------- main ----------------

if __name__ == "__main__":
    key = jax.random.PRNGKey(0)
    k_x, k_g, k_gp, k_up, k_dp = jax.random.split(key, 5)

    B, S = 2, 8
    hidden_states = jax.random.normal(k_x, (B, S, HIDDEN), dtype=jnp.float32)

    params = {
        # nn.Linear(hidden, num_experts, bias=False) -> weight (E, H)
        "gate": 0.02 * jax.random.normal(k_g, (NUM_EXPERTS, HIDDEN), jnp.float32),
        # per-expert nn.Linear weights, stacked over experts (PyTorch layout)
        "gate_proj": 0.02 * jax.random.normal(k_gp, (NUM_EXPERTS, MOE_INTER, HIDDEN), jnp.float32),
        "up_proj": 0.02 * jax.random.normal(k_up, (NUM_EXPERTS, MOE_INTER, HIDDEN), jnp.float32),
        "down_proj": 0.02 * jax.random.normal(k_dp, (NUM_EXPERTS, HIDDEN, MOE_INTER), jnp.float32),
    }

    # one-time init-style repack (kept out of the per-call path)
    prepared = jax.block_until_ready(prepare_moe_params(params))

    fwd = jax.jit(qwen3_moe_sparse_block)
    out, logits = fwd(hidden_states, prepared)
    out = jax.block_until_ready(out)
    logits = jax.block_until_ready(logits)

    ref_out, ref_logits = reference(hidden_states, params)

    assert out.shape == (B, S, HIDDEN)
    assert logits.shape == (B * S, NUM_EXPERTS)
    assert jnp.allclose(logits, ref_logits, rtol=1e-4, atol=1e-5), "router logits mismatch"
    assert jnp.allclose(out, ref_out, rtol=2e-4, atol=2e-5), "moe output mismatch"

    print("KERNEL_OK")
</pallas_src>

<mosaic_0001>
module attributes {stable_mosaic.version = 11 : i64} {
  func.func @_moe_expert_kernel(%arg0: i32, %arg1: i32, %arg2: memref<1x8xi32, #tpu.memory_space<smem>>, %arg3: memref<1x16x1xf32, #tpu.memory_space<vmem>>, %arg4: memref<16x128xf32, #tpu.memory_space<vmem>>, %arg5: memref<1x128x256xf32, #tpu.memory_space<vmem>>, %arg6: memref<1x128x128xf32, #tpu.memory_space<vmem>>, %arg7: memref<16x128xf32, #tpu.memory_space<vmem>>, %arg8: memref<16x128xf32, #tpu.memory_space<vmem>>) attributes {dimension_semantics = [#tpu.dimension_semantics<parallel>, #tpu.dimension_semantics<arbitrary>], iteration_bounds = array<i64: 1, 8>, scalar_prefetch = 1 : i64, scratch_operands = 1 : i64, tpu.core_type = #tpu.core_type<tc>, window_params = [{transform_indices = @transform_0, window_bounds = array<i64: 1, 16, 1>}, {transform_indices = @transform_1, window_bounds = array<i64: 16, 128>}, {transform_indices = @transform_2, window_bounds = array<i64: 1, 128, 256>}, {transform_indices = @transform_3, window_bounds = array<i64: 1, 128, 128>}, {transform_indices = @transform_4, window_bounds = array<i64: 16, 128>}]} {
    %c0_i32 = arith.constant 0 : i32
    %0 = arith.cmpi eq, %arg1, %c0_i32 : i32
    %1 = arith.extui %0 : i1 to i32
    %c0_i32_0 = arith.constant 0 : i32
    %2 = arith.cmpi ne, %1, %c0_i32_0 : i32
    scf.if %2 {
      %cst = arith.constant 0.000000e+00 : f32
      %12 = vector.broadcast %cst : f32 to vector<16x128xf32>
      %c0 = arith.constant 0 : index
      %c0_4 = arith.constant 0 : index
      %13 = vector.load %arg8[%c0, %c0_4] : memref<16x128xf32, #tpu.memory_space<vmem>>, vector<16x128xf32>
      tpu.vector_store %arg8[%c0, %c0_4], %12 {strides = array<i32>} : memref<16x128xf32, #tpu.memory_space<vmem>>, vector<16x128xf32>,
    } else {
    }
    %3 = arith.index_cast %arg0 : i32 to index
    %4 = arith.index_cast %arg1 : i32 to index
    %5 = memref.load %arg2[%3, %4] : memref<1x8xi32, #tpu.memory_space<smem>>
    %c0_i32_1 = arith.constant 0 : i32
    %6 = arith.cmpi sgt, %5, %c0_i32_1 : i32
    %7 = arith.extui %6 : i1 to i32
    %c0_i32_2 = arith.constant 0 : i32
    %8 = arith.cmpi ne, %7, %c0_i32_2 : i32
    scf.if %8 {
      %c0 = arith.constant 0 : index
      %c0_4 = arith.constant 0 : index
      %12 = vector.load %arg4[%c0, %c0_4] : memref<16x128xf32, #tpu.memory_space<vmem>>, vector<16x128xf32>
      %c0_5 = arith.constant 0 : index
      %c0_6 = arith.constant 0 : index
      %c0_7 = arith.constant 0 : index
      %13 = vector.load %arg5[%c0_5, %c0_6, %c0_7] : memref<1x128x256xf32, #tpu.memory_space<vmem>>, vector<1x128x256xf32>
      %14 = vector.shape_cast %13 : vector<1x128x256xf32> to vector<128x256xf32>
      %cst = arith.constant dense<0.000000e+00> : vector<16x256xf32>
      %15 = tpu.matmul %12, %14, %cst {dimension_numbers = #tpu.dot_dimension_numbers<[1], [0], [0], [1], [0, 0, 1, 1], [], []>} : vector<16x128xf32>, vector<128x256xf32>, vector<16x256xf32> -> vector<16x256xf32>
      %16 = vector.extract_strided_slice %15 {offsets = [0, 0], sizes = [16, 128], strides = [1, 1]} : vector<16x256xf32> to vector<16x128xf32>
      %17 = vector.extract_strided_slice %15 {offsets = [0, 128], sizes = [16, 128], strides = [1, 1]} : vector<16x256xf32> to vector<16x128xf32>
      %18 = arith.negf %16 : vector<16x128xf32>
      %19 = math.exp %18 : vector<16x128xf32>
      %cst_8 = arith.constant 1.000000e+00 : f32
      %20 = vector.broadcast %cst_8 : f32 to vector<16x128xf32>
      %21 = arith.addf %20, %19 : vector<16x128xf32>
      %22 = arith.divf %20, %21 : vector<16x128xf32>
      %23 = arith.mulf %16, %22 : vector<16x128xf32>
      %24 = arith.mulf %23, %17 : vector<16x128xf32>
      %c0_9 = arith.constant 0 : index
      %c0_10 = arith.constant 0 : index
      %c0_11 = arith.constant 0 : index
      %25 = vector.load %arg6[%c0_9, %c0_10, %c0_11] : memref<1x128x128xf32, #tpu.memory_space<vmem>>, vector<1x128x128xf32>
      %26 = vector.shape_cast %25 : vector<1x128x128xf32> to vector<128x128xf32>
      %cst_12 = arith.constant dense<0.000000e+00> : vector<16x128xf32>
      %27 = tpu.matmul %24, %26, %cst_12 {dimension_numbers = #tpu.dot_dimension_numbers<[1], [0], [0], [1], [0, 0, 1, 1], [], []>} : vector<16x128xf32>, vector<128x128xf32>, vector<16x128xf32> -> vector<16x128xf32>
      %c0_13 = arith.constant 0 : index
      %c0_14 = arith.constant 0 : index
      %28 = vector.load %arg8[%c0_13, %c0_14] : memref<16x128xf32, #tpu.memory_space<vmem>>, vector<16x128xf32>
      %c0_15 = arith.constant 0 : index
      %c0_16 = arith.constant 0 : index
      %c0_17 = arith.constant 0 : index
      %29 = vector.load %arg3[%c0_15, %c0_16, %c0_17] : memref<1x16x1xf32, #tpu.memory_space<vmem>>, vector<1x16x1xf32>
      %30 = vector.shape_cast %29 : vector<1x16x1xf32> to vector<16x1xf32>
      %31 = vector.broadcast %30 : vector<16x1xf32> to vector<16x128xf32>
      %32 = arith.mulf %27, %31 : vector<16x128xf32>
      %33 = arith.addf %28, %32 : vector<16x128xf32>
      %c0_18 = arith.constant 0 : index
      %c0_19 = arith.constant 0 : index
      %34 = vector.load %arg8[%c0_18, %c0_19] : memref<16x128xf32, #tpu.memory_space<vmem>>, vector<16x128xf32>
      tpu.vector_store %arg8[%c0_18, %c0_19], %33 {strides = array<i32>} : memref<16x128xf32, #tpu.memory_space<vmem>>, vector<16x128xf32>,
    } else {
    }
    %c7_i32 = arith.constant 7 : i32
    %9 = arith.cmpi eq, %arg1, %c7_i32 : i32
    %10 = arith.extui %9 : i1 to i32
    %c0_i32_3 = arith.constant 0 : i32
    %11 = arith.cmpi ne, %10, %c0_i32_3 : i32
    scf.if %11 {
      %c0 = arith.constant 0 : index
      %c0_4 = arith.constant 0 : index
      %12 = vector.load %arg8[%c0, %c0_4] : memref<16x128xf32, #tpu.memory_space<vmem>>, vector<16x128xf32>
      %c0_5 = arith.constant 0 : index
      %c0_6 = arith.constant 0 : index
      %13 = vector.load %arg7[%c0_5, %c0_6] : memref<16x128xf32, #tpu.memory_space<vmem>>, vector<16x128xf32>
      tpu.vector_store %arg7[%c0_5, %c0_6], %12 {strides = array<i32>} : memref<16x128xf32, #tpu.memory_space<vmem>>, vector<16x128xf32>,
    } else {
    }
    return
  }
  func.func @transform_0(%arg0: i32, %arg1: i32, %arg2: memref<1x8xi32, #tpu.memory_space<smem>>) -> (i32, i32, i32) {
    %c0_i32 = arith.constant 0 : i32
    %c0_i32_0 = arith.constant 0 : i32
    return %arg1, %arg0, %c0_i32 : i32, i32, i32
  }
  func.func @transform_1(%arg0: i32, %arg1: i32, %arg2: memref<1x8xi32, #tpu.memory_space<smem>>) -> (i32, i32) {
    %c0_i32 = arith.constant 0 : i32
    %c0_i32_0 = arith.constant 0 : i32
    return %arg0, %c0_i32 : i32, i32
  }
  func.func @transform_2(%arg0: i32, %arg1: i32, %arg2: memref<1x8xi32, #tpu.memory_space<smem>>) -> (i32, i32, i32) {
    %c0_i32 = arith.constant 0 : i32
    %c0_i32_0 = arith.constant 0 : i32
    %c0_i32_1 = arith.constant 0 : i32
    return %arg1, %c0_i32, %c0_i32_0 : i32, i32, i32
  }
  func.func @transform_3(%arg0: i32, %arg1: i32, %arg2: memref<1x8xi32, #tpu.memory_space<smem>>) -> (i32, i32, i32) {
    %c0_i32 = arith.constant 0 : i32
    %c0_i32_0 = arith.constant 0 : i32
    %c0_i32_1 = arith.constant 0 : i32
    return %arg1, %c0_i32, %c0_i32_0 : i32, i32, i32
  }
  func.func @transform_4(%arg0: i32, %arg1: i32, %arg2: memref<1x8xi32, #tpu.memory_space<smem>>) -> (i32, i32) {
    %c0_i32 = arith.constant 0 : i32
    %c0_i32_0 = arith.constant 0 : i32
    return %arg0, %c0_i32 : i32, i32
  }
}

</mosaic_0001>

<llo_original>
// kernel: qwen3_moe_sparse_block.1
$region0: #{qwen3_moe_sparse_block.1}
  #allocation0 [shape = 'u32[]', space=smem, size = 0x4, offset = 0x4, fixed_abs, tag = 'smem constant byte address 0x4 - core index']
  #allocation1 [shape = 'u32[72,128]{1,0:T(1,128)}', space=vmem, size = 0x9000, scoped, tag = 'internal scratch']
  #allocation2 [shape = 'f32[16,128]{1,0:T(8,128)}', space=vmem, size = 0x2000, scoped, tag = 'scratch operand']
  #allocation3 [shape = 's32[1]{0}', space=sflag, size = 0x4, scoped, tag = 'scoped memory for qwen3_moe_sparse_block.1']
  #allocation4 [shape = 'u8[512]{0}', space=smem, size = 0x200, scoped, tag = 'prefetched SMEM operand 0']
  %s0 = inlined_call_operand.vmem [shape: s32[1,8], index: 0, kind: input, shape index: {}]
  %s1 = inlined_call_operand.vmem [shape: f32[8,16,1], index: 1, kind: input, shape index: {}]
  %s2 = inlined_call_operand.vmem [shape: f32[16,128], index: 2, kind: input, shape index: {}]
  %s3 = inlined_call_operand.hbm [shape: f32[8,128,256], index: 3, kind: input, shape index: {}]
  %s4 = inlined_call_operand.hbm [shape: f32[8,128,128], index: 4, kind: input, shape index: {}]
  %s5 = inlined_call_operand.hbm [shape: f32[16,128], index: 5, kind: output, shape index: {}]
  %s6 = sld [smem:[#allocation0]]
  $region69: #{qwen3_moe_sparse_block.1} parent=0
    _
  %s8 = ssub.s32 1, %s6
  %s9 = scalar_select 0, %s8, %s6
  %s11 = sshll.u32 %s0, 4
  %s12 = int_to_ptr.vmem [resolvable:$true] %s11
  %14 = dma.vmem_to_smem %s12, 16, [#allocation4], [#allocation3]
  %16 = dma.done [#allocation3], 16
  %17 = sfence
  $region1: #{qwen3_moe_sparse_block.1} parent=0
    #allocation5 [shape = 'u8[262144]{0}', space=vmem, size = 0x40000, scoped, tag = 'input window, operand 3']
    #allocation6 [shape = 's32[2]{0}', space=sflag, size = 0x8, scoped, tag = 'scoped memory for qwen3_moe_sparse_block.1']
    #allocation7 [shape = 's32[2]{0}', space=sflag, size = 0x8, scoped, tag = 'scoped memory for qwen3_moe_sparse_block.1']
    #allocation8 [shape = 'u8[131072]{0}', space=vmem, size = 0x20000, scoped, tag = 'input window, operand 4']
    #allocation9 [shape = 's32[2]{0}', space=sflag, size = 0x8, scoped, tag = 'scoped memory for qwen3_moe_sparse_block.1']
    #allocation10 [shape = 'u8[8192]{0}', space=vmem, size = 0x2000, scoped, tag = 'output window, operand 0, single buffered']
    %18 = vsyncpa [#allocation6], 0
    %s19 = scalar_lea.sflag [#allocation6], 1
    %20 = vsyncpa %s19, 0
    %21 = vsyncpa [#allocation9], 0
    %s22 = scalar_lea.sflag [#allocation9], 1
    %23 = vsyncpa %s22, 0
    %24 = vsyncpa [#allocation7], 0
    loop: start=0, step=1, limit=10
    $region2: #{qwen3_moe_sparse_block.1} parent=1 // loop_pre_header
      _
    $region3: #{qwen3_moe_sparse_block.1} parent=1 // loop_header
      %s26 = sphi 0, %s30
      %p27 = scmp.ge.s32.totalorder %s26, 10
      %s33 = sphi 0, %s45
      %s34 = sphi 0, %s41
      %s35 = sphi 0, %s33
      %s36 = sphi 0, %s34
      %s37 = sphi 0, %s35
      %s38 = sphi 0, %s36
      %s50 = sphi 0, %s52
      %s53 = sphi 0, %s50
      %s54 = sphi 0, %s53
      %s70 = sphi 0, %s54
      %s76 = sphi 0, %s78
      %s79 = sphi 0, %s76
      %s80 = sphi 0, %s79
      %s96 = sphi 0, %s80
      %s102 = sphi 0, %s104
      %s105 = sphi 0, %s102
      %s106 = sphi 0, %s105
      %s122 = sphi 0, %s106
      %s128 = sphi 0, %s130
      %s131 = sphi 0, %s128
      %s132 = sphi 0, %s131
      %s148 = sphi 0, %s132
      %s154 = sphi 0, %s156
      %s157 = sphi 0, %s154
      %s158 = sphi 0, %s157
      %s174 = sphi 0, %s158
    $region4: #{qwen3_moe_sparse_block.1} parent=1 // loop_header_branch
      %29 = sbr.rel (%p27) target = $region8
    $region5: #{qwen3_moe_sparse_block.1} parent=1 // loop_body
      %s31 = ssub.s32 %s26, 1
      %s32 = ssub.s32 %s26, 2
      %s39 = sadd.s32 1, %s34
      %p40 = scmp.ge.s32.totalorder %s39, 8
      %s41 = scalar_select %p40, 0, %s39
      %s42 = sadd.s32 1, %s33
      %s43 = scalar_select %p40, %s42, %s33
      %p44 = scmp.ge.s32.totalorder %s43, 1
      %s45 = scalar_select %p44, 0, %s43
      %s46 = ssub.s32 %s34, %s41
      %s47 = ssub.s32 %s33, %s45
      %s48 = sor.u32 %s46, %s47
      %p49 = scmp.eq.s32.totalorder %s48, 0
      %s51 = sadd.s32 %s50, 1
      %s52 = scalar_select %p49, %s50, %s51
      %p55 = pneg %p49
      %p56 = scmp.eq.s32.totalorder %s26, 7
      %p57 = por %p55, %p56
      %p58 = scmp.ne.s32.totalorder %s50, %s53
      %p59 = scmp.eq.s32.totalorder %s26, 0
      %p60 = por %p58, %p59
      %p61 = scmp.ne.s32.totalorder %s50, %s53
      %p62 = scmp.eq.s32.totalorder %s31, 7
      %p63 = por %p61, %p62
      %p64 = scmp.ne.s32.totalorder %s53, %s54
      %p65 = scmp.eq.s32.totalorder %s31, 0
      %p66 = por %p64, %p65
      %p67 = scmp.ne.s32.totalorder %s53, %s54
      %p68 = scmp.eq.s32.totalorder %s32, 7
      %p69 = por %p67, %p68
      %p71 = scmp.ne.s32.totalorder %s54, %s70
      %p72 = scmp.eq.s32.totalorder %s32, 0
      %p73 = por %p71, %p72
      %s74 = ssub.s32 %s33, %s45
      %p75 = scmp.eq.s32.totalorder %s74, 0
      %s77 = sadd.s32 %s76, 1
      %s78 = scalar_select %p75, %s76, %s77
      %p81 = pneg %p75
      %p82 = scmp.eq.s32.totalorder %s26, 7
      %p83 = por %p81, %p82
      %p84 = scmp.ne.s32.totalorder %s76, %s79
      %p85 = scmp.eq.s32.totalorder %s26, 0
      %p86 = por %p84, %p85
      %p87 = scmp.ne.s32.totalorder %s76, %s79
      %p88 = scmp.eq.s32.totalorder %s31, 7
      %p89 = por %p87, %p88
      %p90 = scmp.ne.s32.totalorder %s79, %s80
      %p91 = scmp.eq.s32.totalorder %s31, 0
      %p92 = por %p90, %p91
      %p93 = scmp.ne.s32.totalorder %s79, %s80
      %p94 = scmp.eq.s32.totalorder %s32, 7
      %p95 = por %p93, %p94
      %p97 = scmp.ne.s32.totalorder %s80, %s96
      %p98 = scmp.eq.s32.totalorder %s32, 0
      %p99 = por %p97, %p98
      %s100 = ssub.s32 %s34, %s41
      %p101 = scmp.eq.s32.totalorder %s100, 0
      %s103 = sadd.s32 %s102, 1
      %s104 = scalar_select %p101, %s102, %s103
      %p107 = pneg %p101
      %p108 = scmp.eq.s32.totalorder %s26, 7
      %p109 = por %p107, %p108
      %p110 = scmp.ne.s32.totalorder %s102, %s105
      %p111 = scmp.eq.s32.totalorder %s26, 0
      %p112 = por %p110, %p111
      %p113 = scmp.ne.s32.totalorder %s102, %s105
      %p114 = scmp.eq.s32.totalorder %s31, 7
      %p115 = por %p113, %p114
      %p116 = scmp.ne.s32.totalorder %s105, %s106
      %p117 = scmp.eq.s32.totalorder %s31, 0
      %p118 = por %p116, %p117
      %p119 = scmp.ne.s32.totalorder %s105, %s106
      %p120 = scmp.eq.s32.totalorder %s32, 7
      %p121 = por %p119, %p120
      %p123 = scmp.ne.s32.totalorder %s106, %s122
      %p124 = scmp.eq.s32.totalorder %s32, 0
      %p125 = por %p123, %p124
      %s126 = ssub.s32 %s34, %s41
      %p127 = scmp.eq.s32.totalorder %s126, 0
      %s129 = sadd.s32 %s128, 1
      %s130 = scalar_select %p127, %s128, %s129
      %p133 = pneg %p127
      %p134 = scmp.eq.s32.totalorder %s26, 7
      %p135 = por %p133, %p134
      %p136 = scmp.ne.s32.totalorder %s128, %s131
      %p137 = scmp.eq.s32.totalorder %s26, 0
      %p138 = por %p136, %p137
      %p139 = scmp.ne.s32.totalorder %s128, %s131
      %p140 = scmp.eq.s32.totalorder %s31, 7
      %p141 = por %p139, %p140
      %p142 = scmp.ne.s32.totalorder %s131, %s132
      %p143 = scmp.eq.s32.totalorder %s31, 0
      %p144 = por %p142, %p143
      %p145 = scmp.ne.s32.totalorder %s131, %s132
      %p146 = scmp.eq.s32.totalorder %s32, 7
      %p147 = por %p145, %p146
      %p149 = scmp.ne.s32.totalorder %s132, %s148
      %p150 = scmp.eq.s32.totalorder %s32, 0
      %p151 = por %p149, %p150
      %s152 = ssub.s32 %s33, %s45
      %p153 = scmp.eq.s32.totalorder %s152, 0
      %s155 = sadd.s32 %s154, 1
      %s156 = scalar_select %p153, %s154, %s155
      %p159 = pneg %p153
      %p160 = scmp.eq.s32.totalorder %s26, 7
      %p161 = por %p159, %p160
      %p162 = scmp.ne.s32.totalorder %s154, %s157
      %p163 = scmp.eq.s32.totalorder %s26, 0
      %p164 = por %p162, %p163
      %p165 = scmp.ne.s32.totalorder %s154, %s157
      %p166 = scmp.eq.s32.totalorder %s31, 7
      %p167 = por %p165, %p166
      %p168 = scmp.ne.s32.totalorder %s157, %s158
      %p169 = scmp.eq.s32.totalorder %s31, 0
      %p170 = por %p168, %p169
      %p171 = scmp.ne.s32.totalorder %s157, %s158
      %p172 = scmp.eq.s32.totalorder %s32, 7
      %p173 = por %p171, %p172
      %p175 = scmp.ne.s32.totalorder %s158, %s174
      %p176 = scmp.eq.s32.totalorder %s32, 0
      %p177 = por %p175, %p176
      %p178 = scmp.le.s32.totalorder 1, %s26
      %p179 = scmp.lt.s32.totalorder %s26, 9
      %p180 = pnand %p178, %p179
      %p181 = pneg %p180
      // Predicated region
      $region9: #{qwen3_moe_sparse_block.1} parent=5 // pred_check
        _
      $region10: #{qwen3_moe_sparse_block.1} parent=5 // pred_check_branch
        %183 = sbr.rel (%p180) target = $region12
      $region11: #{qwen3_moe_sparse_block.1} parent=5 // pred_region
        %s184 = ssub.s32 %s26, 1
        // Predicated region
        $region13: #{qwen3_moe_sparse_block.1} parent=11 // pred_check
          %p185 = pneg %p92
        $region14: #{qwen3_moe_sparse_block.1} parent=11 // pred_check_branch
          %187 = sbr.rel (%p185) target = $region16
        $region15: #{qwen3_moe_sparse_block.1} parent=11 // pred_region
          %s188 = smul.u32 2, %s35
          %p189 = scmp.lt.s32.totalorder %s188, 1
          %s190 = scalar_select %p189, %s188, 1
          %s191 = smul.addr %s190, 8
          %s192 = scalar_lea.vmem %s2, %s191
          %s193 = smul.u32 2, %s35
        $region16: #{qwen3_moe_sparse_block.1} parent=11 // pred_fallthru
          _
      $region12: #{qwen3_moe_sparse_block.1} parent=5 // pred_fallthru
        _
      %p194 = scmp.lt.s32.totalorder %s26, 8
      // Predicated region
      $region17: #{qwen3_moe_sparse_block.1} parent=5 // pred_check
        %p195 = pneg %p194
      $region18: #{qwen3_moe_sparse_block.1} parent=5 // pred_check_branch
        %197 = sbr.rel (%p195) target = $region20
      $region19: #{qwen3_moe_sparse_block.1} parent=5 // pred_region
        // Predicated region
        $region21: #{qwen3_moe_sparse_block.1} parent=19 // pred_check
          %p198 = pneg %p60
        $region22: #{qwen3_moe_sparse_block.1} parent=19 // pred_check_branch
          %200 = sbr.rel (%p198) target = $region24
        $region23: #{qwen3_moe_sparse_block.1} parent=19 // pred_region
          %s201 = smul.u32 2, %s33
          %p202 = scmp.lt.s32.totalorder %s34, 7
          %s203 = scalar_select %p202, %s34, 7
          %p204 = scmp.lt.s32.totalorder %s201, 1
          %s205 = scalar_select %p204, %s201, 1
          %s206 = smul.addr %s203, 2
          %s207 = sadd.s32 %s205, %s206
          %s208 = smul.addr %s207, 8
          %s209 = scalar_lea.vmem %s1, %s208
          %s210 = smul.u32 2, %s33
        $region24: #{qwen3_moe_sparse_block.1} parent=19 // pred_fallthru
          _
        // Predicated region
        $region25: #{qwen3_moe_sparse_block.1} parent=19 // pred_check
          %p211 = pneg %p112
        $region26: #{qwen3_moe_sparse_block.1} parent=19 // pred_check_branch
          %213 = sbr.rel (%p211) target = $region28
        $region27: #{qwen3_moe_sparse_block.1} parent=19 // pred_region
          %s214 = sand.u32 %s102, 1
          %s215 = scalar_lea.sflag [#allocation6], %s214
          %s216 = sand.u32 %s102, 1
          %s217 = smul.addr %s216, 256
          %s218 = scalar_lea.vmem [#allocation5], %s217
          %220 = vsyncadd %s215, 0
          %s221 = smul.addr %s34, 32
          %s222 = smul.addr %s221, 8
          %s223 = scalar_lea.hbm %s3, %s222
          %s224 = sshll.u32 %s223, 4
          %s225 = int_to_ptr.hbm [resolvable:$true] %s224
          %s226 = sshll.u32 %s218, 4
          %s227 = int_to_ptr.vmem [resolvable:$true] %s226
          %232 = dma.hbm_to_vmem [thread:$0]  %s225, 4096, %s227, %s215, 256, 256, 16
        $region28: #{qwen3_moe_sparse_block.1} parent=19 // pred_fallthru
          _
        // Predicated region
        $region29: #{qwen3_moe_sparse_block.1} parent=19 // pred_check
          %p233 = pneg %p138
        $region30: #{qwen3_moe_sparse_block.1} parent=19 // pred_check_branch
          %235 = sbr.rel (%p233) target = $region32
        $region31: #{qwen3_moe_sparse_block.1} parent=19 // pred_region
          %s236 = sand.u32 %s128, 1
          %s237 = scalar_lea.sflag [#allocation9], %s236
          %s238 = sand.u32 %s128, 1
          %s239 = smul.addr %s238, 128
          %s240 = scalar_lea.vmem [#allocation8], %s239
          %242 = vsyncadd %s237, 0
          %s243 = smul.addr %s34, 16
          %s244 = smul.addr %s243, 8
          %s245 = scalar_lea.hbm %s4, %s244
          %s246 = sshll.u32 %s245, 4
          %s247 = int_to_ptr.hbm [resolvable:$true] %s246
          %s248 = sshll.u32 %s240, 4
          %s249 = int_to_ptr.vmem [resolvable:$true] %s248
          %254 = dma.hbm_to_vmem [thread:$0]  %s247, 2048, %s249, %s237, 128, 128, 8
        $region32: #{qwen3_moe_sparse_block.1} parent=19 // pred_fallthru
          _
      $region20: #{qwen3_moe_sparse_block.1} parent=5 // pred_fallthru
        _
      %p255 = scmp.le.s32.totalorder 1, %s26
      %p256 = scmp.lt.s32.totalorder %s26, 9
      %p257 = pnand %p255, %p256
      %p258 = pneg %p257
      // Predicated region
      $region33: #{qwen3_moe_sparse_block.1} parent=5 // pred_check
        _
      $region34: #{qwen3_moe_sparse_block.1} parent=5 // pred_check_branch
        %260 = sbr.rel (%p257) target = $region36
      $region35: #{qwen3_moe_sparse_block.1} parent=5 // pred_region
        %s261 = ssub.s32 %s26, 1
        %s262 = sand.u32 %s105, 1
        %s263 = scalar_lea.sflag [#allocation6], %s262
        %s264 = sand.u32 %s105, 1
        %s265 = smul.addr %s264, 256
        %s266 = scalar_lea.vmem [#allocation5], %s265
        // Predicated region
        $region37: #{qwen3_moe_sparse_block.1} parent=35 // pred_check
          %p267 = pneg %p118
        $region38: #{qwen3_moe_sparse_block.1} parent=35 // pred_check_branch
          %269 = sbr.rel (%p267) target = $region40
        $region39: #{qwen3_moe_sparse_block.1} parent=35 // pred_region
          %271 = dma.done %s263, 4096
        $region40: #{qwen3_moe_sparse_block.1} parent=35 // pred_fallthru
          _
        %s272 = sand.u32 %s131, 1
        %s273 = scalar_lea.sflag [#allocation9], %s272
        %s274 = sand.u32 %s131, 1
        %s275 = smul.addr %s274, 128
        %s276 = scalar_lea.vmem [#allocation8], %s275
        // Predicated region
        $region41: #{qwen3_moe_sparse_block.1} parent=35 // pred_check
          %p277 = pneg %p144
        $region42: #{qwen3_moe_sparse_block.1} parent=35 // pred_check_branch
          %279 = sbr.rel (%p277) target = $region44
        $region43: #{qwen3_moe_sparse_block.1} parent=35 // pred_region
          %281 = dma.done %s273, 2048
        $region44: #{qwen3_moe_sparse_block.1} parent=35 // pred_fallthru
          _
        %s282 = smul.u32 2, %s35
        %p283 = scmp.lt.s32.totalorder %s36, 7
        %s284 = scalar_select %p283, %s36, 7
        %p285 = scmp.lt.s32.totalorder %s282, 1
        %s286 = scalar_select %p285, %s282, 1
        %s287 = smul.addr %s284, 2
        %s288 = sadd.s32 %s286, %s287
        %s289 = smul.addr %s288, 8
        %s290 = scalar_lea.vmem %s1, %s289
        %p291 = pneg %p66
        %p292 = pneg %p63
        %s293 = smul.u32 2, %s35
        %p294 = scmp.lt.s32.totalorder %s293, 1
        %s295 = scalar_select %p294, %s293, 1
        %s296 = smul.addr %s295, 8
        %s297 = scalar_lea.vmem %s2, %s296
        %p298 = pneg %p92
        %p299 = pneg %p89
        %s300 = sand.u32 %s105, 1
        %s301 = scalar_lea.sflag [#allocation6], %s300
        %s302 = sand.u32 %s105, 1
        %s303 = smul.addr %s302, 256
        %s304 = scalar_lea.vmem [#allocation5], %s303
        %p305 = pneg %p118
        %p306 = pneg %p115
        %s307 = sand.u32 %s131, 1
        %s308 = scalar_lea.sflag [#allocation9], %s307
        %s309 = sand.u32 %s131, 1
        %s310 = smul.addr %s309, 128
        %s311 = scalar_lea.vmem [#allocation8], %s310
        %p312 = pneg %p144
        %p313 = pneg %p141
        %p314 = pneg %p170
        %p315 = pneg %p167
        %s316 = smul.u32 2, %s35
        %p317 = scmp.lt.s32.totalorder %s36, 7
        %s318 = scalar_select %p317, %s36, 7
        %p319 = scmp.lt.s32.totalorder %s316, 1
        %s320 = scalar_select %p319, %s316, 1
        %s321 = smul.addr %s318, 2
        %s322 = sadd.s32 %s320, %s321
        %s323 = smul.addr %s322, 8
        %s324 = scalar_lea.vmem %s1, %s323
        %s325 = smul.u32 2, %s35
        %s326 = smul.u32 2, %s35
        %p327 = scmp.lt.s32.totalorder %s326, 1
        %s328 = scalar_select %p327, %s326, 1
        %s329 = smul.addr %s328, 8
        %s330 = scalar_lea.vmem %s2, %s329
        %s331 = smul.u32 2, %s35
        %s332 = smul.u32 2, %s35
        %p333 = scmp.eq.s32.totalorder %s36, 0
        // Predicated region
        $region45: #{qwen3_moe_sparse_block.1} parent=35 // pred_check
          %p334 = pneg %p333
        $region46: #{qwen3_moe_sparse_block.1} parent=35 // pred_check_branch
          %336 = sbr.rel (%p334) target = $region48
        $region47: #{qwen3_moe_sparse_block.1} parent=35 // pred_region
          %337 = vst [vmem:[#allocation2] sm:$0xff] 0.0
          %338 = vst [vmem:[#allocation2 + $0x8] sm:$0xff] 0.0
        $region48: #{qwen3_moe_sparse_block.1} parent=35 // pred_fallthru
          _
        %s339 = sshra.s32 %s36, 7
        %s340 = sand.u32 %s36, 127
        %s341 = sadd.s32 %s339, %s35
        %s342 = smul.u32 %s341, 128
        %s343 = sshra.s32 %s36, 7
        %s344 = sand.u32 %s36, 127
        %s345 = sadd.s32 %s342, %s344
        %s346 = sld [smem:[#allocation4 + %s345]]
        %p347 = scmp.gt.s32.totalorder %s346, 0
        // Predicated region
        $region49: #{qwen3_moe_sparse_block.1} parent=35 // pred_check
          %p348 = pneg %p347
        $region50: #{qwen3_moe_sparse_block.1} parent=35 // pred_check_branch
          %350 = sbr.rel (%p348) target = $region52
        $region51: #{qwen3_moe_sparse_block.1} parent=35 // pred_region
          %v351 = vld [vmem:[%s330] sm:$0xff]
          %v352 = vld [vmem:[%s330 + $0x8] sm:$0xff]
          %v353 = vld [vmem:[%s266] sm:$0xff]
          %v354 = vld [vmem:[%s266 + $0x8] sm:$0xff]
          %v355 = vld [vmem:[%s266 + $0x10] sm:$0xff]
          %v356 = vld [vmem:[%s266 + $0x18] sm:$0xff]
          %v357 = vld [vmem:[%s266 + $0x20] sm:$0xff]
          %v358 = vld [vmem:[%s266 + $0x28] sm:$0xff]
          %v359 = vld [vmem:[%s266 + $0x30] sm:$0xff]
          %v360 = vld [vmem:[%s266 + $0x38] sm:$0xff]
          %v361 = vld [vmem:[%s266 + $0x40] sm:$0xff]
          %v362 = vld [vmem:[%s266 + $0x48] sm:$0xff]
          %v363 = vld [vmem:[%s266 + $0x50] sm:$0xff]
          %v364 = vld [vmem:[%s266 + $0x58] sm:$0xff]
          %v365 = vld [vmem:[%s266 + $0x60] sm:$0xff]
          %v366 = vld [vmem:[%s266 + $0x68] sm:$0xff]
          %v367 = vld [vmem:[%s266 + $0x70] sm:$0xff]
          %v368 = vld [vmem:[%s266 + $0x78] sm:$0xff]
          %v369 = vld [vmem:[%s266 + $0x80] sm:$0xff]
          %v370 = vld [vmem:[%s266 + $0x88] sm:$0xff]
          %v371 = vld [vmem:[%s266 + $0x90] sm:$0xff]
          %v372 = vld [vmem:[%s266 + $0x98] sm:$0xff]
          %v373 = vld [vmem:[%s266 + $0xa0] sm:$0xff]
          %v374 = vld [vmem:[%s266 + $0xa8] sm:$0xff]
          %v375 = vld [vmem:[%s266 + $0xb0] sm:$0xff]
          %v376 = vld [vmem:[%s266 + $0xb8] sm:$0xff]
          %v377 = vld [vmem:[%s266 + $0xc0] sm:$0xff]
          %v378 = vld [vmem:[%s266 + $0xc8] sm:$0xff]
          %v379 = vld [vmem:[%s266 + $0xd0] sm:$0xff]
          %v380 = vld [vmem:[%s266 + $0xd8] sm:$0xff]
          %v381 = vld [vmem:[%s266 + $0xe0] sm:$0xff]
          %v382 = vld [vmem:[%s266 + $0xe8] sm:$0xff]
          %v383 = vld [vmem:[%s266 + $0xf0] sm:$0xff]
          %v384 = vld [vmem:[%s266 + $0xf8] sm:$0xff]
          %385 = vmatpush.msra.mxu0 %v383
          %386 = vmatpush.msra.mxu0 %v381
          %387 = vmatpush.msra.mxu0 %v379
          %388 = vmatpush.msra.mxu0 %v377
          %389 = vmatpush.msra.mxu0 %v375
          %390 = vmatpush.msra.mxu0 %v373
          %391 = vmatpush.msra.mxu0 %v371
          %392 = vmatpush.msra.mxu0 %v369
          %393 = vmatpush.msra.mxu0 %v367
          %394 = vmatpush.msra.mxu0 %v365
          %395 = vmatpush.msra.mxu0 %v363
          %396 = vmatpush.msra.mxu0 %v361
          %397 = vmatpush.msra.mxu0 %v359
          %398 = vmatpush.msra.mxu0 %v357
          %399 = vmatpush.msra.mxu0 %v355
          %400 = vmatpush.msra.mxu0 %v353
          %401 = vmatmul.f32.gmra.mxu0 %v351
          %v402 = vpop.f32.mrf.mxu0
          %v403 = vadd.f32 0.0, %v402
          %404 = vmatmul.f32.gmra.mxu0 %v352
          %v405 = vpop.f32.mrf.mxu0
          %v406 = vadd.f32 0.0, %v405
          %407 = vdwg.mxu0
          %408 = vmatpush.msra.mxu0 %v384
          %409 = vmatpush.msra.mxu0 %v382
          %410 = vmatpush.msra.mxu0 %v380
          %411 = vmatpush.msra.mxu0 %v378
          %412 = vmatpush.msra.mxu0 %v376
          %413 = vmatpush.msra.mxu0 %v374
          %414 = vmatpush.msra.mxu0 %v372
          %415 = vmatpush.msra.mxu0 %v370
          %416 = vmatpush.msra.mxu0 %v368
          %417 = vmatpush.msra.mxu0 %v366
          %418 = vmatpush.msra.mxu0 %v364
          %419 = vmatpush.msra.mxu0 %v362
          %420 = vmatpush.msra.mxu0 %v360
          %421 = vmatpush.msra.mxu0 %v358
          %422 = vmatpush.msra.mxu0 %v356
          %423 = vmatpush.msra.mxu0 %v354
          %424 = vmatmul.f32.gmra.mxu0 %v351
          %v425 = vpop.f32.mrf.mxu0
          %v426 = vadd.f32 0.0, %v425
          %427 = vmatmul.f32.gmra.mxu0 %v352
          %v428 = vpop.f32.mrf.mxu0
          %v429 = vadd.f32 0.0, %v428
          %430 = vdwg.mxu0
          %v431 = vxor.u32 %v403, 2147483648
          %v432 = vxor.u32 %v406, 2147483648
          %v433 = vmul.f32 %v431, 1.442695
          %v434 = vpow.pop %v433
          %v435 = vmul.f32 %v432, 1.442695
          %v436 = vpow.pop %v435
          %v437 = vadd.f32 %v434, 1.0
          %v438 = vadd.f32 %v436, 1.0
          %v439 = vrcp.pop %v437
          %v440 = vmul.f32 %v437, %v439
          %v441 = vsub.f32 1.0, %v440
          %v442 = vmul.f32 %v439, %v441
          %v443 = vadd.f32 %v439, %v442
          %vm444 = vweird.f32 %v437
          %vm445 = vweird.f32 %v439
          %vm446 = vmor %vm444, %vm445
          %v447 = vsel %vm446, %v439, %v443
          %v448 = vand.u32 2147483647, %v437
          %vm449 = vcmp.eq.f32.partialorder %v448, 8.507059e+37
          %v450 = vand.u32 %v437, 2147483648
          %v451 = vor.u32 1.1754944e-38, %v450
          %v452 = vsel %vm449, %v451, %v447
          %v453 = vmul.f32 1.0, %v452
          %v454 = vrcp.pop %v438
          %v455 = vmul.f32 %v438, %v454
          %v456 = vsub.f32 1.0, %v455
          %v457 = vmul.f32 %v454, %v456
          %v458 = vadd.f32 %v454, %v457
          %vm459 = vweird.f32 %v438
          %vm460 = vweird.f32 %v454
          %vm461 = vmor %vm459, %vm460
          %v462 = vsel %vm461, %v454, %v458
          %v463 = vand.u32 2147483647, %v438
          %vm464 = vcmp.eq.f32.partialorder %v463, 8.507059e+37
          %v465 = vand.u32 %v438, 2147483648
          %v466 = vor.u32 1.1754944e-38, %v465
          %v467 = vsel %vm464, %v466, %v462
          %v468 = vmul.f32 1.0, %v467
          %v469 = vmul.f32 %v403, %v453
          %v470 = vmul.f32 %v406, %v468
          %v471 = vmul.f32 %v469, %v426
          %v472 = vmul.f32 %v470, %v429
          %v473 = vld [vmem:[%s276] sm:$0xff]
          %v474 = vld [vmem:[%s276 + $0x8] sm:$0xff]
          %v475 = vld [vmem:[%s276 + $0x10] sm:$0xff]
          %v476 = vld [vmem:[%s276 + $0x18] sm:$0xff]
          %v477 = vld [vmem:[%s276 + $0x20] sm:$0xff]
          %v478 = vld [vmem:[%s276 + $0x28] sm:$0xff]
          %v479 = vld [vmem:[%s276 + $0x30] sm:$0xff]
          %v480 = vld [vmem:[%s276 + $0x38] sm:$0xff]
          %v481 = vld [vmem:[%s276 + $0x40] sm:$0xff]
          %v482 = vld [vmem:[%s276 + $0x48] sm:$0xff]
          %v483 = vld [vmem:[%s276 + $0x50] sm:$0xff]
          %v484 = vld [vmem:[%s276 + $0x58] sm:$0xff]
          %v485 = vld [vmem:[%s276 + $0x60] sm:$0xff]
          %v486 = vld [vmem:[%s276 + $0x68] sm:$0xff]
          %v487 = vld [vmem:[%s276 + $0x70] sm:$0xff]
          %v488 = vld [vmem:[%s276 + $0x78] sm:$0xff]
          %489 = vmatpush.msra.mxu0 %v488
          %490 = vmatpush.msra.mxu0 %v487
          %491 = vmatpush.msra.mxu0 %v486
          %492 = vmatpush.msra.mxu0 %v485
          %493 = vmatpush.msra.mxu0 %v484
          %494 = vmatpush.msra.mxu0 %v483
          %495 = vmatpush.msra.mxu0 %v482
          %496 = vmatpush.msra.mxu0 %v481
          %497 = vmatpush.msra.mxu0 %v480
          %498 = vmatpush.msra.mxu0 %v479
          %499 = vmatpush.msra.mxu0 %v478
          %500 = vmatpush.msra.mxu0 %v477
          %501 = vmatpush.msra.mxu0 %v476
          %502 = vmatpush.msra.mxu0 %v475
          %503 = vmatpush.msra.mxu0 %v474
          %504 = vmatpush.msra.mxu0 %v473
          %505 = vmatmul.f32.gmra.mxu0 %v471
          %v506 = vpop.f32.mrf.mxu0
          %v507 = vadd.f32 0.0, %v506
          %508 = vmatmul.f32.gmra.mxu0 %v472
          %v509 = vpop.f32.mrf.mxu0
          %v510 = vadd.f32 0.0, %v509
          %511 = vdwg.mxu0
          %v512 = vld [vmem:[#allocation2] sm:$0xff]
          %v513 = vld [vmem:[#allocation2 + $0x8] sm:$0xff]
          %v514 = vld [vmem:[%s324] sm:$0xff]
          %v515 = vld [vmem:[%s324 + $0x8] sm:$0xff]
          %517 = vset.pattern.permute.xlu0 0
          %518 = vperm.xlu0 %517, %v514
          %v519 = vpop.permute.xlu0 %518
          %522 = vset.pattern.permute.xlu0 0
          %523 = vperm.xlu0 %522, %v515
          %v524 = vpop.permute.xlu0 %523
          %v526 = vmul.f32 %v507, %v519
          %v527 = vmul.f32 %v510, %v524
          %v528 = vadd.f32 %v512, %v526
          %v529 = vadd.f32 %v513, %v527
          %530 = vst [vmem:[#allocation2] sm:$0xff] %v528
          %531 = vst [vmem:[#allocation2 + $0x8] sm:$0xff] %v529
        $region52: #{qwen3_moe_sparse_block.1} parent=35 // pred_fallthru
          _
        %p532 = scmp.eq.s32.totalorder %s36, 7
        // Predicated region
        $region53: #{qwen3_moe_sparse_block.1} parent=35 // pred_check
          %p533 = pneg %p532
        $region54: #{qwen3_moe_sparse_block.1} parent=35 // pred_check_branch
          %535 = sbr.rel (%p533) target = $region56
        $region55: #{qwen3_moe_sparse_block.1} parent=35 // pred_region
          %v536 = vld [vmem:[#allocation2] sm:$0xff]
          %v537 = vld [vmem:[#allocation2 + $0x8] sm:$0xff]
          %538 = vst [vmem:[#allocation10] sm:$0xff] %v536
          %539 = vst [vmem:[#allocation10 + $0x8] sm:$0xff] %v537
        $region56: #{qwen3_moe_sparse_block.1} parent=35 // pred_fallthru
          _
        // Predicated region
        $region57: #{qwen3_moe_sparse_block.1} parent=35 // pred_check
          %p540 = pneg %p167
        $region58: #{qwen3_moe_sparse_block.1} parent=35 // pred_check_branch
          %542 = sbr.rel (%p540) target = $region60
        $region59: #{qwen3_moe_sparse_block.1} parent=35 // pred_region
          %s543 = smul.u32 2, %s35
          %545 = vsyncadd [#allocation7], 0
          %s546 = smul.addr %s543, 8
          %s547 = scalar_lea.hbm %s5, %s546
          %s548 = sshll.u32 [#allocation10], 4
          %s549 = int_to_ptr.vmem [resolvable:$true] %s548
          %s550 = sshll.u32 %s547, 4
          %s551 = int_to_ptr.hbm [resolvable:$true] %s550
          %556 = dma.vmem_to_hbm [thread:$0]  %s549, 256, %s551, [#allocation7], 128, 128, 8
        $region60: #{qwen3_moe_sparse_block.1} parent=35 // pred_fallthru
          _
        // Predicated region
        $region61: #{qwen3_moe_sparse_block.1} parent=35 // pred_check
          %p557 = pneg %p167
        $region62: #{qwen3_moe_sparse_block.1} parent=35 // pred_check_branch
          %559 = sbr.rel (%p557) target = $region64
        $region63: #{qwen3_moe_sparse_block.1} parent=35 // pred_region
          %561 = dma.done [#allocation7], 256
        $region64: #{qwen3_moe_sparse_block.1} parent=35 // pred_fallthru
          _
      $region36: #{qwen3_moe_sparse_block.1} parent=5 // pred_fallthru
        _
      %p562 = scmp.le.s32.totalorder 2, %s26
      // Predicated region
      $region65: #{qwen3_moe_sparse_block.1} parent=5 // pred_check
        %p563 = pneg %p562
      $region66: #{qwen3_moe_sparse_block.1} parent=5 // pred_check_branch
        %565 = sbr.rel (%p563) target = $region68
      $region67: #{qwen3_moe_sparse_block.1} parent=5 // pred_region
        %s566 = ssub.s32 %s26, 2
      $region68: #{qwen3_moe_sparse_block.1} parent=5 // pred_fallthru
        _
    $region6: #{qwen3_moe_sparse_block.1} parent=1 // loop_footer
      %s30 = sadd.s32 1, %s26
    $region7: #{qwen3_moe_sparse_block.1} parent=1 // loop_footer_branch
      %25 = sbr.rel target = $region3
    $region8: #{qwen3_moe_sparse_block.1} parent=1 // loop_exit
      _
    %567 = vsyncpa [#allocation6], 1
    %s568 = scalar_lea.sflag [#allocation6], 1
    %569 = vsyncpa %s568, 1
    %570 = vsyncpa [#allocation9], 1
    %s571 = scalar_lea.sflag [#allocation9], 1
    %572 = vsyncpa %s571, 1
    %573 = vsyncpa [#allocation7], 1
    %s574 = scalar_lea.sflag [#allocation7], 1
    %575 = vsyncpa %s574, 1

</llo_original>
